<compile_context>
chip_gen: v5e
topology: v5e:2x2
jax: 0.10.0
libtpu: 0.0.40
codegen_flags: <defaults>
</compile_context>

<pallas_src>
import functools
import math

import jax
import jax.numpy as jnp
from jax import lax
from jax.experimental import pallas as pl
from jax.experimental.pallas import tpu as pltpu


_NEG_BIG = -1e30   # "minus infinity" without inf-inf NaN hazards
_EPS = 1e-12       # F.normalize default eps


# ---------------------------------------------------------------------------
# Small-N monolithic kernel (whole problem resident in VMEM).
# ---------------------------------------------------------------------------
def _w2v2_loss_small_kernel(x_ref, q_ref, loss_ref, acc_ref, *, temperature,
                            matmul_dtype):
    x = x_ref[...].astype(jnp.float32)          # (N, C)
    q = q_ref[...].astype(jnp.float32)          # (N, C)

    # x / max(||x||, eps) == x * rsqrt(max(||x||^2, eps^2))  (EUP rsqrt).
    x_n = x * lax.rsqrt(jnp.maximum(jnp.sum(x * x, axis=-1, keepdims=True),
                                    _EPS * _EPS))
    q_n = q * lax.rsqrt(jnp.maximum(jnp.sum(q * q, axis=-1, keepdims=True),
                                    _EPS * _EPS))

    # Fold 1/temperature into the LHS; cast MXU operands (bf16 by default).
    a = (x_n * (1.0 / temperature)).astype(matmul_dtype)
    b = q_n.astype(matmul_dtype)

    # Contract dim 1 of both operands (no explicit q.T), accumulate in f32.
    sim = lax.dot_general(a, b, (((1,), (1,)), ((), ())),
                          preferred_element_type=jnp.float32)    # (N, N)

    n = sim.shape[0]
    col_ids = lax.broadcasted_iota(jnp.int32, sim.shape, 1)
    row_ids = lax.broadcasted_iota(jnp.int32, sim.shape, 0)

    # Target logit from the same MXU sim (consistent with lse under bf16).
    tgt = jnp.sum(jnp.where(row_ids == col_ids, sim, 0.0),
                  axis=-1, keepdims=True)                        # (N, 1)

    row_max = jnp.max(sim, axis=-1, keepdims=True)
    lse = jnp.log(jnp.sum(jnp.exp(sim - row_max), axis=-1, keepdims=True)) + row_max

    loss_ref[0, 0] = jnp.sum(lse - tgt) * (1.0 / n)

    # First-occurrence argmax (min column index among ties), like torch.argmax.
    pred = jnp.min(jnp.where(sim == row_max, col_ids, n), axis=-1, keepdims=True)
    targets = lax.broadcasted_iota(jnp.int32, (n, 1), 0)
    acc_ref[0, 0] = jnp.sum((pred == targets).astype(jnp.float32)) * (1.0 / n)


def _w2v2_loss_small(x_flat, q_flat, temperature, matmul_dtype):
    kernel = functools.partial(_w2v2_loss_small_kernel, temperature=temperature,
                               matmul_dtype=matmul_dtype)
    loss, acc = pl.pallas_call(
        kernel,
        out_shape=(
            jax.ShapeDtypeStruct((1, 1), jnp.float32),
            jax.ShapeDtypeStruct((1, 1), jnp.float32),
        ),
        in_specs=[
            pl.BlockSpec(memory_space=pltpu.MemorySpace.VMEM),
            pl.BlockSpec(memory_space=pltpu.MemorySpace.VMEM),
        ],
        out_specs=(
            pl.BlockSpec(memory_space=pltpu.MemorySpace.SMEM),
            pl.BlockSpec(memory_space=pltpu.MemorySpace.SMEM),
        ),
    )(x_flat, q_flat)
    return loss[0, 0], acc[0, 0]


# ---------------------------------------------------------------------------
# Flash-style tiled kernel (padded N, asymmetric row/col tiles).
# ---------------------------------------------------------------------------
def _w2v2_tiled_kernel(x_ref, q_ref, lse_ref, tgt_ref, pred_ref,
                       m_sc, l_sc, idx_sc, tgt_sc,
                       *, row_tile, col_tile, num_valid):
    i = pl.program_id(0)                   # row block (parallel)
    j = pl.program_id(1)                   # column block (reduction)
    last_j = pl.num_programs(1) - 1

    @pl.when(j == 0)
    def _():
        m_sc[...] = jnp.full_like(m_sc, _NEG_BIG)
        l_sc[...] = jnp.zeros_like(l_sc)
        idx_sc[...] = jnp.zeros_like(idx_sc)
        tgt_sc[...] = jnp.zeros_like(tgt_sc)

    x = x_ref[...]                         # (row_tile, C), normalized & /T
    q = q_ref[...]                         # (col_tile, C), normalized

    # Similarity tile on the MXU (contract dim 1 of both; no q.T materialized).
    sim = lax.dot_general(x, q, (((1,), (1,)), ((), ())),
                          preferred_element_type=jnp.float32)    # (rt, ct)

    # Tiny iotas only (no per-step tile^2 iota); broadcast where needed.
    local_row = lax.broadcasted_iota(jnp.int32, (row_tile, 1), 0)
    local_col = lax.broadcasted_iota(jnp.int32, (1, col_tile), 1)
    col_ids = local_col + j * col_tile                           # global columns

    if num_valid is not None:              # padded columns -> effectively -inf
        sim = jnp.where(col_ids < num_valid, sim, _NEG_BIG)

    # Target logit: diagonal elements of the global sim matrix in this tile.
    offset = j * col_tile - i * row_tile
    @pl.when(jnp.logical_and(offset > -col_tile, offset < row_tile))
    def _():
        diag = local_row == (local_col + offset)
        tgt_sc[...] += jnp.sum(jnp.where(diag, sim, 0.0), axis=-1, keepdims=True)

    # Online log-sum-exp + first-occurrence argmax across column blocks.
    blk_max = jnp.max(sim, axis=-1, keepdims=True)               # (rt, 1)
    big = jnp.iinfo(jnp.int32).max
    blk_arg = jnp.min(jnp.where(sim == blk_max, col_ids, big),
                      axis=-1, keepdims=True)                    # (rt, 1)

    m_prev = m_sc[...]
    m_new = jnp.maximum(m_prev, blk_max)
    l_sc[...] = (l_sc[...] * jnp.exp(m_prev - m_new)
                 + jnp.sum(jnp.exp(sim - m_new), axis=-1, keepdims=True))
    # Strict '>' keeps the earlier (smaller) column index across block ties.
    idx_sc[...] = jnp.where(blk_max > m_prev, blk_arg, idx_sc[...])
    m_sc[...] = m_new

    @pl.when(j == last_j)
    def _():
        lse_ref[...] = m_sc[...] + jnp.log(l_sc[...])
        tgt_ref[...] = tgt_sc[...]
        pred_ref[...] = idx_sc[...]


def _w2v2_loss_tiled(x_flat, q_flat, temperature, row_tile, col_tile,
                     matmul_dtype, vmem_limit_bytes):
    N, C = x_flat.shape
    xf = x_flat.astype(jnp.float32)
    qf = q_flat.astype(jnp.float32)
    # F.normalize: x / max(||x||, eps) == x * rsqrt(max(||x||^2, eps^2)).
    xn = xf * lax.rsqrt(jnp.maximum(jnp.sum(xf * xf, axis=-1, keepdims=True),
                                    _EPS * _EPS))
    qn = qf * lax.rsqrt(jnp.maximum(jnp.sum(qf * qf, axis=-1, keepdims=True),
                                    _EPS * _EPS))
    xs = xn * (1.0 / temperature)          # fold temperature into the LHS

    # Pad N up to a multiple of both tiles (zero rows; masked in the kernel).
    lcm = row_tile * col_tile // math.gcd(row_tile, col_tile)
    n_pad = ((N + lcm - 1) // lcm) * lcm
    if n_pad != N:
        pad = n_pad - N
        xs = jnp.pad(xs, ((0, pad), (0, 0)))
        qn = jnp.pad(qn, ((0, pad), (0, 0)))

    xs = xs.astype(matmul_dtype)           # bf16 by default: MXU-native,
    qn = qn.astype(matmul_dtype)           # halves q re-read HBM traffic.

    if vmem_limit_bytes is None:
        itemsize = jnp.dtype(matmul_dtype).itemsize
        block_bytes = 2 * (row_tile * C + col_tile * C) * itemsize   # 2x-buffered inputs
        tmp_bytes = 6 * row_tile * col_tile * 4                      # sim + temporaries
        vmem_limit_bytes = int(min(100 * 2**20,
                                   max(32 * 2**20, block_bytes + tmp_bytes + (8 << 20))))

    kernel = functools.partial(_w2v2_tiled_kernel, row_tile=row_tile,
                               col_tile=col_tile,
                               num_valid=(N if n_pad != N else None))
    grid = (n_pad // row_tile, n_pad // col_tile)

    lse, tgt, pred = pl.pallas_call(
        kernel,
        out_shape=(
            jax.ShapeDtypeStruct((n_pad, 1), jnp.float32),
            jax.ShapeDtypeStruct((n_pad, 1), jnp.float32),
            jax.ShapeDtypeStruct((n_pad, 1), jnp.int32),
        ),
        grid_spec=pltpu.PrefetchScalarGridSpec(
            num_scalar_prefetch=0,
            grid=grid,
            in_specs=[
                pl.BlockSpec((row_tile, C), lambda i, j: (i, 0)),   # x row block
                pl.BlockSpec((col_tile, C), lambda i, j: (j, 0)),   # q column block
            ],
            out_specs=[
                pl.BlockSpec((row_tile, 1), lambda i, j: (i, 0)),
                pl.BlockSpec((row_tile, 1), lambda i, j: (i, 0)),
                pl.BlockSpec((row_tile, 1), lambda i, j: (i, 0)),
            ],
            scratch_shapes=[
                pltpu.VMEM((row_tile, 1), jnp.float32),   # running max
                pltpu.VMEM((row_tile, 1), jnp.float32),   # running sum-exp
                pltpu.VMEM((row_tile, 1), jnp.int32),     # running argmax index
                pltpu.VMEM((row_tile, 1), jnp.float32),   # target logit
            ],
        ),
        compiler_params=pltpu.CompilerParams(
            dimension_semantics=("parallel", "arbitrary"),
            vmem_limit_bytes=vmem_limit_bytes),
    )(xs, qn)

    # Trivial O(N) reduction in the wrapper; padded rows are dropped here.
    targets = jnp.arange(N, dtype=jnp.int32)
    loss = jnp.mean(lse[:N, 0] - tgt[:N, 0])
    acc = jnp.mean((pred[:N, 0] == targets).astype(jnp.float32))
    return loss, acc


# ---------------------------------------------------------------------------
# Public wrapper (mirrors Wav2Vec2Loss.forward).
# ---------------------------------------------------------------------------
def wav2vec2_loss(x, quantized, mask=None, *, temperature=0.1,
                  negative_samples=100, row_tile=512, col_tile=256,
                  matmul_dtype=jnp.bfloat16, small_n_max=256,
                  vmem_limit_bytes=None):
    # `mask` and `negative_samples` are accepted for API parity but unused,
    # exactly as in the reference forward pass.
    del mask, negative_samples
    B, T, C = x.shape
    N = B * T
    x_flat = x.reshape(N, C)
    q_flat = quantized.reshape(N, C)

    if N <= small_n_max:
        # Monolithic path only for genuinely small N (keeps (N,N) temporaries
        # well under scoped VMEM on all generations, incl. v7x).
        return _w2v2_loss_small(x_flat, q_flat, temperature, matmul_dtype)

    # Keep >= 2 row blocks when possible (v7x dual TensorCore sharding of the
    # parallel axis) and avoid excessive padding for moderate N.
    if N < 2 * row_tile:
        row_tile = col_tile
    return _w2v2_loss_tiled(x_flat, q_flat, temperature, row_tile, col_tile,
                            matmul_dtype, vmem_limit_bytes)


def _reference_loss(x, quantized, temperature=0.1):
    """Pure-JAX reference mirroring the PyTorch forward (full f32 matmul)."""
    B, T, C = x.shape
    xf = x.reshape(-1, C).astype(jnp.float32)
    qf = quantized.reshape(-1, C).astype(jnp.float32)
    xf = xf / jnp.maximum(jnp.linalg.norm(xf, axis=-1, keepdims=True), _EPS)
    qf = qf / jnp.maximum(jnp.linalg.norm(qf, axis=-1, keepdims=True), _EPS)
    sim = jnp.dot(xf, qf.T, precision=lax.Precision.HIGHEST) / temperature
    n = sim.shape[0]
    targets = jnp.arange(n)
    lse = jax.nn.logsumexp(sim, axis=-1)
    loss = jnp.mean(lse - sim[jnp.arange(n), targets])
    acc = jnp.mean((jnp.argmax(sim, axis=-1) == targets).astype(jnp.float32))
    return loss, acc


if __name__ == "__main__":
    root = jax.random.PRNGKey(0)
    kx, kq, kx2, kq2, kx3, kq3 = jax.random.split(root, 6)

    # --- small-N monolithic path (B=2, T=8, C=32 -> N=16) --------------------
    B, T, C = 2, 8, 32
    x = jax.random.normal(kx, (B, T, C), dtype=jnp.float32)
    quantized = jax.random.normal(kq, (B, T, C), dtype=jnp.float32)
    ref_loss, ref_acc = _reference_loss(x, quantized, temperature=0.1)

    loss_f32, acc_f32 = wav2vec2_loss(x, quantized, temperature=0.1,
                                      matmul_dtype=jnp.float32)
    jax.block_until_ready(loss_f32)
    assert jnp.allclose(loss_f32, ref_loss, atol=1e-4, rtol=1e-4), (loss_f32, ref_loss)
    assert jnp.allclose(acc_f32, ref_acc, atol=1e-6), (acc_f32, ref_acc)

    loss_bf, acc_bf = wav2vec2_loss(x, quantized, temperature=0.1)   # bf16 MXU default
    jax.block_until_ready(loss_bf)
    assert jnp.abs(loss_bf - ref_loss) < 5e-2, (loss_bf, ref_loss)
    assert jnp.abs(acc_bf - ref_acc) <= 2.0 / (B * T) + 1e-6, (acc_bf, ref_acc)

    # --- tiled path, tile-aligned (N = 512, grid (2, 2)) ---------------------
    B2, T2, C2 = 2, 256, 128
    x2 = jax.random.normal(kx2, (B2, T2, C2), dtype=jnp.float32)
    q2 = jax.random.normal(kq2, (B2, T2, C2), dtype=jnp.float32)
    n2 = B2 * T2
    ref_loss2, ref_acc2 = _reference_loss(x2, q2, temperature=0.1)

    loss2_f32, acc2_f32 = wav2vec2_loss(x2, q2, temperature=0.1,
                                        matmul_dtype=jnp.float32)
    jax.block_until_ready(loss2_f32)
    assert jnp.allclose(loss2_f32, ref_loss2, atol=2e-3, rtol=2e-3), (loss2_f32, ref_loss2)
    assert jnp.abs(acc2_f32 - ref_acc2) <= 1.5 / n2, (acc2_f32, ref_acc2)

    loss2, acc2 = wav2vec2_loss(x2, q2, temperature=0.1)             # bf16 MXU default
    jax.block_until_ready(loss2)
    assert jnp.abs(loss2 - ref_loss2) < 5e-2, (loss2, ref_loss2)
    # Allow a few rows' argmax to flip on bf16-rounding near-ties.
    assert jnp.abs(acc2 - ref_acc2) <= 4.0 / n2 + 1e-6, (acc2, ref_acc2)

    # --- tiled path with padding (N = 300, padded to 512) --------------------
    B3, T3, C3 = 3, 100, 96
    x3 = jax.random.normal(kx3, (B3, T3, C3), dtype=jnp.float32)
    q3 = jax.random.normal(kq3, (B3, T3, C3), dtype=jnp.float32)
    n3 = B3 * T3
    ref_loss3, ref_acc3 = _reference_loss(x3, q3, temperature=0.1)
    loss3, acc3 = wav2vec2_loss(x3, q3, temperature=0.1)
    jax.block_until_ready(loss3)
    assert jnp.abs(loss3 - ref_loss3) < 5e-2, (loss3, ref_loss3)
    assert jnp.abs(acc3 - ref_acc3) <= 4.0 / n3 + 1e-6, (acc3, ref_acc3)

    print("KERNEL_OK")
</pallas_src>

<mosaic_0001>
module attributes {stable_mosaic.version = 11 : i64} {
  func.func @_w2v2_loss_small_kernel(%arg0: memref<16x32xf32, #tpu.memory_space<vmem>>, %arg1: memref<16x32xf32, #tpu.memory_space<vmem>>, %arg2: memref<1x1xf32, #tpu.memory_space<smem>>, %arg3: memref<1x1xf32, #tpu.memory_space<smem>>) attributes {dimension_semantics = [], scalar_prefetch = 0 : i64, scratch_operands = 0 : i64, tpu.core_type = #tpu.core_type<tc>} {
    %c0 = arith.constant 0 : index
    %c0_0 = arith.constant 0 : index
    %0 = vector.load %arg0[%c0, %c0_0] : memref<16x32xf32, #tpu.memory_space<vmem>>, vector<16x32xf32>
    %c0_1 = arith.constant 0 : index
    %c0_2 = arith.constant 0 : index
    %1 = vector.load %arg1[%c0_1, %c0_2] : memref<16x32xf32, #tpu.memory_space<vmem>>, vector<16x32xf32>
    %2 = arith.mulf %0, %0 : vector<16x32xf32>
    %cst = arith.constant dense<0.000000e+00> : vector<16xf32>
    %3 = vector.multi_reduction <add>, %2, %cst [1] : vector<16x32xf32> to vector<16xf32>
    %4 = vector.shape_cast %3 : vector<16xf32> to vector<16x1xf32>
    %cst_3 = arith.constant 1.000000e-24 : f32
    %5 = vector.broadcast %cst_3 : f32 to vector<16x1xf32>
    %6 = arith.maximumf %4, %5 : vector<16x1xf32>
    %7 = math.rsqrt %6 : vector<16x1xf32>
    %8 = vector.broadcast %7 : vector<16x1xf32> to vector<16x32xf32>
    %9 = arith.mulf %0, %8 : vector<16x32xf32>
    %10 = arith.mulf %1, %1 : vector<16x32xf32>
    %cst_4 = arith.constant dense<0.000000e+00> : vector<16xf32>
    %11 = vector.multi_reduction <add>, %10, %cst_4 [1] : vector<16x32xf32> to vector<16xf32>
    %12 = vector.shape_cast %11 : vector<16xf32> to vector<16x1xf32>
    %cst_5 = arith.constant 1.000000e-24 : f32
    %13 = vector.broadcast %cst_5 : f32 to vector<16x1xf32>
    %14 = arith.maximumf %12, %13 : vector<16x1xf32>
    %15 = math.rsqrt %14 : vector<16x1xf32>
    %16 = vector.broadcast %15 : vector<16x1xf32> to vector<16x32xf32>
    %17 = arith.mulf %1, %16 : vector<16x32xf32>
    %cst_6 = arith.constant 1.000000e+01 : f32
    %18 = vector.broadcast %cst_6 : f32 to vector<16x32xf32>
    %19 = arith.mulf %9, %18 : vector<16x32xf32>
    %cst_7 = arith.constant dense<0.000000e+00> : vector<16x16xf32>
    %20 = tpu.matmul %19, %17, %cst_7 {dimension_numbers = #tpu.dot_dimension_numbers<[1], [1], [0], [0], [0, 0, 1, 0], [], []>} : vector<16x32xf32>, vector<16x32xf32>, vector<16x16xf32> -> vector<16x16xf32>
    %21 = tpu.iota {dimensions = array<i32: 1>} : vector<16x16xi32>
    %22 = tpu.iota {dimensions = array<i32: 0>} : vector<16x16xi32>
    %23 = arith.cmpi eq, %22, %21 : vector<16x16xi32>
    %cst_8 = arith.constant 0.000000e+00 : f32
    %24 = vector.broadcast %cst_8 : f32 to vector<16x16xf32>
    %25 = arith.select %23, %20, %24 : vector<16x16xi1>, vector<16x16xf32>
    %cst_9 = arith.constant dense<0.000000e+00> : vector<16xf32>
    %26 = vector.multi_reduction <add>, %25, %cst_9 [1] : vector<16x16xf32> to vector<16xf32>
    %27 = vector.shape_cast %26 : vector<16xf32> to vector<16x1xf32>
    %cst_10 = arith.constant dense<0xFF800000> : vector<16xf32>
    %28 = vector.multi_reduction <maximumf>, %20, %cst_10 [1] : vector<16x16xf32> to vector<16xf32>
    %29 = vector.shape_cast %28 : vector<16xf32> to vector<16x1xf32>
    %30 = vector.broadcast %29 : vector<16x1xf32> to vector<16x16xf32>
    %31 = arith.subf %20, %30 : vector<16x16xf32>
    %32 = math.exp %31 : vector<16x16xf32>
    %cst_11 = arith.constant dense<0.000000e+00> : vector<16xf32>
    %33 = vector.multi_reduction <add>, %32, %cst_11 [1] : vector<16x16xf32> to vector<16xf32>
    %34 = vector.shape_cast %33 : vector<16xf32> to vector<16x1xf32>
    %35 = math.log %34 : vector<16x1xf32>
    %36 = arith.addf %35, %29 : vector<16x1xf32>
    %37 = arith.subf %36, %27 : vector<16x1xf32>
    %38 = vector.shape_cast %37 : vector<16x1xf32> to vector<1x16x1xf32>
    %cst_12 = arith.constant dense<0.000000e+00> : vector<1xf32>
    %39 = vector.multi_reduction <add>, %38, %cst_12 [1, 2] : vector<1x16x1xf32> to vector<1xf32>
    %40 = vector.shape_cast %39 : vector<1xf32> to vector<1x1x1xf32>
    %41 = vector.extract %40[0, 0, 0] : f32 from vector<1x1x1xf32>
    %cst_13 = arith.constant 6.250000e-02 : f32
    %42 = arith.mulf %41, %cst_13 : f32
    %c0_14 = arith.constant 0 : index
    %c0_15 = arith.constant 0 : index
    %43 = memref.load %arg2[%c0_14, %c0_15] : memref<1x1xf32, #tpu.memory_space<smem>>
    memref.store %42, %arg2[%c0_14, %c0_15] : memref<1x1xf32, #tpu.memory_space<smem>>
    %44 = vector.broadcast %29 : vector<16x1xf32> to vector<16x16xf32>
    %45 = arith.cmpf oeq, %20, %44 : vector<16x16xf32>
    %c16_i32 = arith.constant 16 : i32
    %46 = vector.broadcast %c16_i32 : i32 to vector<16x16xi32>
    %47 = arith.select %45, %21, %46 : vector<16x16xi1>, vector<16x16xi32>
    %cst_16 = arith.constant dense<2147483647> : vector<16xi32>
    %48 = vector.multi_reduction <minsi>, %47, %cst_16 [1] : vector<16x16xi32> to vector<16xi32>
    %49 = vector.shape_cast %48 : vector<16xi32> to vector<16x1xi32>
    %50 = tpu.iota {dimensions = array<i32: 0>} : vector<16x1xi32>
    %51 = arith.cmpi eq, %49, %50 : vector<16x1xi32>
    %52 = arith.extui %51 : vector<16x1xi1> to vector<16x1xi32>
    %53 = arith.sitofp %52 : vector<16x1xi32> to vector<16x1xf32>
    %54 = vector.shape_cast %53 : vector<16x1xf32> to vector<1x16x1xf32>
    %cst_17 = arith.constant dense<0.000000e+00> : vector<1xf32>
    %55 = vector.multi_reduction <add>, %54, %cst_17 [1, 2] : vector<1x16x1xf32> to vector<1xf32>
    %56 = vector.shape_cast %55 : vector<1xf32> to vector<1x1x1xf32>
    %57 = vector.extract %56[0, 0, 0] : f32 from vector<1x1x1xf32>
    %cst_18 = arith.constant 6.250000e-02 : f32
    %58 = arith.mulf %57, %cst_18 : f32
    %c0_19 = arith.constant 0 : index
    %c0_20 = arith.constant 0 : index
    %59 = memref.load %arg3[%c0_19, %c0_20] : memref<1x1xf32, #tpu.memory_space<smem>>
    memref.store %58, %arg3[%c0_19, %c0_20] : memref<1x1xf32, #tpu.memory_space<smem>>
    return
  }
}

</mosaic_0001>

<llo_original>
// kernel: tpu_custom_call.1
$region0: #{tpu_custom_call.1}
  #allocation0 [shape = 'u32[]', space=smem, size = 0x4, offset = 0x4, fixed_abs, tag = 'smem constant byte address 0x4 - core index']
  #allocation1 [shape = 'u32[72,128]{1,0:T(1,128)}', space=vmem, size = 0x9000, scoped, tag = 'internal scratch']
  %s0 = inlined_call_operand.hbm [shape: f32[16,32], index: 0, kind: input, shape index: {}]
  %s1 = inlined_call_operand.hbm [shape: f32[16,32], index: 1, kind: input, shape index: {}]
  %s2 = inlined_call_operand.hbm [shape: f32[1,1], index: 2, kind: output, shape index: {0}]
  %s3 = inlined_call_operand.hbm [shape: f32[1,1], index: 3, kind: output, shape index: {1}]
  %4 = xla_tuple %s2, %s3
  %s5 = sld [smem:[#allocation0]]
  $region34: #{tpu_custom_call.1} parent=0
    _
  %s7 = ssub.s32 1, %s5
  %s8 = scalar_select 0, %s7, %s5
  $region1: #{tpu_custom_call.1} parent=0
    #allocation2 [shape = 'u8[8192]{0}', space=vmem, size = 0x2000, scoped, tag = 'input window, operand 0, single buffered']
    #allocation3 [shape = 's32[1]{0}', space=sflag, size = 0x4, scoped, tag = 'scoped memory for tpu_custom_call.1']
    #allocation4 [shape = 's32[1]{0}', space=sflag, size = 0x4, scoped, tag = 'scoped memory for tpu_custom_call.1']
    #allocation5 [shape = 'u8[8192]{0}', space=vmem, size = 0x2000, scoped, tag = 'input window, operand 1, single buffered']
    #allocation6 [shape = 's32[1]{0}', space=sflag, size = 0x4, scoped, tag = 'scoped memory for tpu_custom_call.1']
    #allocation7 [shape = 'u8[512]{0}', space=smem, size = 0x200, scoped, tag = 'output window, operand 0, single buffered']
    #allocation8 [shape = 'u8[512]{0}', space=smem, size = 0x200, scoped, tag = 'output window, operand 1, single buffered']
    #allocation9 [shape = 's32[1]{0}', space=sflag, size = 0x4, scoped, tag = 'scoped memory for tpu_custom_call.1']
    %9 = vsyncpa [#allocation3], 0
    %10 = vsyncpa [#allocation6], 0
    %11 = vsyncpa [#allocation4], 0
    %12 = vsyncpa [#allocation9], 0
    // Predicated region
    $region2: #{tpu_custom_call.1} parent=1 // pred_check
      _
    $region3: #{tpu_custom_call.1} parent=1 // pred_check_branch
      %14 = sbr.rel (0) target = $region5
    $region4: #{tpu_custom_call.1} parent=1 // pred_region
      %16 = vsyncadd [#allocation3], 0
      %s17 = sshll.u32 %s0, 4
      %s18 = int_to_ptr.hbm [resolvable:$true] %s17
      %s19 = sshll.u32 [#allocation2], 4
      %s20 = int_to_ptr.vmem [resolvable:$true] %s19
      %25 = dma.hbm_to_vmem [thread:$0]  %s18, 256, %s20, [#allocation3], 128, 128, 8
    $region5: #{tpu_custom_call.1} parent=1 // pred_fallthru
      _
    // Predicated region
    $region6: #{tpu_custom_call.1} parent=1 // pred_check
      _
    $region7: #{tpu_custom_call.1} parent=1 // pred_check_branch
      %27 = sbr.rel (0) target = $region9
    $region8: #{tpu_custom_call.1} parent=1 // pred_region
      %29 = vsyncadd [#allocation6], 0
      %s30 = sshll.u32 %s1, 4
      %s31 = int_to_ptr.hbm [resolvable:$true] %s30
      %s32 = sshll.u32 [#allocation5], 4
      %s33 = int_to_ptr.vmem [resolvable:$true] %s32
      %38 = dma.hbm_to_vmem [thread:$0]  %s31, 256, %s33, [#allocation6], 128, 128, 8
    $region9: #{tpu_custom_call.1} parent=1 // pred_fallthru
      _
    // Predicated region
    $region10: #{tpu_custom_call.1} parent=1 // pred_check
      _
    $region11: #{tpu_custom_call.1} parent=1 // pred_check_branch
      %40 = sbr.rel (0) target = $region13
    $region12: #{tpu_custom_call.1} parent=1 // pred_region
      %42 = dma.done [#allocation3], 256
    $region13: #{tpu_custom_call.1} parent=1 // pred_fallthru
      _
    // Predicated region
    $region14: #{tpu_custom_call.1} parent=1 // pred_check
      _
    $region15: #{tpu_custom_call.1} parent=1 // pred_check_branch
      %44 = sbr.rel (0) target = $region17
    $region16: #{tpu_custom_call.1} parent=1 // pred_region
      %46 = dma.done [#allocation6], 256
    $region17: #{tpu_custom_call.1} parent=1 // pred_fallthru
      _
    %v47 = vld [vmem:[#allocation2] sm:$0xff]
    %v48 = vld [vmem:[#allocation2 + $0x8] sm:$0xff]
    %v49 = vld [vmem:[#allocation5] sm:$0xff]
    %v50 = vld [vmem:[#allocation5 + $0x8] sm:$0xff]
    %v51 = vmul.f32 %v47, %v47
    %v52 = vmul.f32 %v48, %v48
    %vm53 = vcmask 261120
    %v54 = vsel %vm53, %v51, 0.0
    %55 = vadd.xlane.f32.xlu0 %v54
    %v56 = vpop.xlane.xlu0 %55
    %v57 = vsel %vm53, %v52, 0.0
    %58 = vadd.xlane.f32.xlu0 %v57
    %v59 = vpop.xlane.xlu0 %58
    %v60 = vmax.f32 %v56, 1e-24
    %v61 = vmax.f32 %v59, 1e-24
    %v62 = vrsqrt.pop %v60
    %v63 = vmul.f32 %v62, %v60
    %v64 = vmul.f32 %v63, %v62
    %v65 = vmul.f32 0.5, %v64
    %v66 = vsub.f32 1.5, %v65
    %v67 = vmul.f32 %v62, %v66
    %vm68 = vweird.f32 %v60
    %vm69 = vweird.f32 %v62
    %vm70 = vmor %vm68, %vm69
    %v71 = vsel %vm70, %v62, %v67
    %v72 = vrsqrt.pop %v61
    %v73 = vmul.f32 %v72, %v61
    %v74 = vmul.f32 %v73, %v72
    %v75 = vmul.f32 0.5, %v74
    %v76 = vsub.f32 1.5, %v75
    %v77 = vmul.f32 %v72, %v76
    %vm78 = vweird.f32 %v61
    %vm79 = vweird.f32 %v72
    %vm80 = vmor %vm78, %vm79
    %v81 = vsel %vm80, %v72, %v77
    %v82 = vmul.f32 %v47, %v71
    %v83 = vmul.f32 %v48, %v81
    %v84 = vmul.f32 %v49, %v49
    %v85 = vmul.f32 %v50, %v50
    %v86 = vsel %vm53, %v84, 0.0
    %87 = vadd.xlane.f32.xlu0 %v86
    %v88 = vpop.xlane.xlu0 %87
    %v89 = vsel %vm53, %v85, 0.0
    %90 = vadd.xlane.f32.xlu0 %v89
    %v91 = vpop.xlane.xlu0 %90
    %v92 = vmax.f32 %v88, 1e-24
    %v93 = vmax.f32 %v91, 1e-24
    %v94 = vrsqrt.pop %v92
    %v95 = vmul.f32 %v94, %v92
    %v96 = vmul.f32 %v95, %v94
    %v97 = vmul.f32 0.5, %v96
    %v98 = vsub.f32 1.5, %v97
    %v99 = vmul.f32 %v94, %v98
    %vm100 = vweird.f32 %v92
    %vm101 = vweird.f32 %v94
    %vm102 = vmor %vm100, %vm101
    %v103 = vsel %vm102, %v94, %v99
    %v104 = vrsqrt.pop %v93
    %v105 = vmul.f32 %v104, %v93
    %v106 = vmul.f32 %v105, %v104
    %v107 = vmul.f32 0.5, %v106
    %v108 = vsub.f32 1.5, %v107
    %v109 = vmul.f32 %v104, %v108
    %vm110 = vweird.f32 %v93
    %vm111 = vweird.f32 %v104
    %vm112 = vmor %vm110, %vm111
    %v113 = vsel %vm112, %v104, %v109
    %v114 = vmul.f32 %v49, %v103
    %v115 = vmul.f32 %v50, %v113
    %v116 = vmul.f32 %v82, 10.0
    %v117 = vmul.f32 %v83, 10.0
    %v119 = vsel %vm53, %v116, 0
    %v122 = vsel %vm53, %v117, 0
    %v125 = vsel %vm53, %v114, 0
    %v128 = vsel %vm53, %v115, 0
    %130 = vmatpush.xpose.msra.mxu0 0.0
    %131 = vmatpush.xpose.msra.mxu0 0.0
    %132 = vmatpush.xpose.msra.mxu0 0.0
    %133 = vmatpush.xpose.msra.mxu0 0.0
    %134 = vmatpush.xpose.msra.mxu0 0.0
    %135 = vmatpush.xpose.msra.mxu0 0.0
    %136 = vmatpush.xpose.msra.mxu0 0.0
    %137 = vmatpush.xpose.msra.mxu0 0.0
    %138 = vmatpush.xpose.msra.mxu0 0.0
    %139 = vmatpush.xpose.msra.mxu0 0.0
    %140 = vmatpush.xpose.msra.mxu0 0.0
    %141 = vmatpush.xpose.msra.mxu0 0.0
    %142 = vmatpush.xpose.msra.mxu0 0.0
    %143 = vmatpush.xpose.msra.mxu0 0.0
    %144 = vmatpush.xpose.msra.mxu0 %v128
    %145 = vmatpush.xpose.msra.mxu0 %v125
    %146 = vmatmul.f32.gmra.mxu0 %v119
    %v147 = vpop.f32.mrf.mxu0
    %v148 = vadd.f32 0.0, %v147
    %149 = vmatmul.f32.gmra.mxu0 %v122
    %v150 = vpop.f32.mrf.mxu0
    %v151 = vadd.f32 0.0, %v150
    %152 = vdwg.mxu0
    %v153 = vlaneseq
    %v154 = vand.u32 %v153, 127
    %v155 = vlaneseq
    %v156 = vshrl.u32 %v155, 7
    %v157 = vadd.s32 %v156, 8
    %vm158 = vcmp.eq.s32.totalorder %v156, %v154
    %vm159 = vcmp.eq.s32.totalorder %v157, %v154
    %v160 = vsel %vm158, %v148, 0.0
    %v161 = vsel %vm159, %v151, 0.0
    %vm162 = vcmask 130048
    %v163 = vsel %vm162, %v160, 0.0
    %164 = vadd.xlane.f32.xlu0 %v163
    %v165 = vpop.xlane.xlu0 %164
    %v166 = vsel %vm162, %v161, 0.0
    %167 = vadd.xlane.f32.xlu0 %v166
    %v168 = vpop.xlane.xlu0 %167
    %v169 = vsel %vm162, %v148, -inf
    %170 = vmax.xlane.f32.xlu0 %v169
    %v171 = vpop.xlane.xlu0 %170
    %v172 = vsel %vm162, %v151, -inf
    %173 = vmax.xlane.f32.xlu0 %v172
    %v174 = vpop.xlane.xlu0 %173
    %v175 = vsub.f32 %v148, %v171
    %v176 = vsub.f32 %v151, %v174
    %v177 = vmul.f32 %v175, 1.442695
    %v178 = vpow.pop %v177
    %v179 = vmul.f32 %v176, 1.442695
    %v180 = vpow.pop %v179
    %v181 = vsel %vm162, %v178, 0.0
    %182 = vadd.xlane.f32.xlu0 %v181
    %v183 = vpop.xlane.xlu0 %182
    %v184 = vsel %vm162, %v180, 0.0
    %185 = vadd.xlane.f32.xlu0 %v184
    %v186 = vpop.xlane.xlu0 %185
    %v187 = vlog2.pop %v183
    %v188 = vmul.f32 %v187, 0.6931472
    %v189 = vlog2.pop %v186
    %v190 = vmul.f32 %v189, 0.6931472
    %v191 = vadd.f32 %v188, %v171
    %v192 = vadd.f32 %v190, %v174
    %v193 = vsub.f32 %v191, %v165
    %v194 = vsub.f32 %v192, %v168
    %vm195 = vcmask 7168
    %v196 = vsel %vm195, %v193, 0.0
    %v197 = vsel %vm195, %v194, 0.0
    %v198 = vadd.f32 %v196, %v197
    %199 = vadd.xlane.f32.xlu0 %v198
    %v200 = vpop.xlane.xlu0 %199
    %v201 = vrot.slane %v200, 4
    %v202 = vadd.f32 %v200, %v201
    %v203 = vrot.slane %v202, 2
    %v204 = vadd.f32 %v202, %v203
    %v205 = vrot.slane %v204, 1
    %v206 = vadd.f32 %v204, %v205
    %s207 = vtos %v206
    %s208 = smul.f32 %s207, 0.0625
    %s209 = scalar_lea.smem [#allocation7], 0
    %210 = sst [smem:[%s209]] %s208
    %vm211 = vcmp.eq.f32.partialorder %v148, %v171
    %vm212 = vcmp.eq.f32.partialorder %v151, %v174
    %v213 = vsel %vm211, %v154, 16
    %v214 = vsel %vm212, %v154, 16
    %v215 = vsel %vm162, %v213, 2147483647
    %v216 = vand.u32 %v215, 65535
    %v217 = vshra.s32 %v215, 16
    %v218 = vcvt.s32.f32 %v216
    %v219 = vcvt.s32.f32 %v217
    %220 = vmin.xlane.f32.xlu0 %v219
    %v221 = vpop.xlane.xlu0 %220
    %vm222 = vcmp.eq.f32.partialorder %v219, %v221
    %v223 = vsel %vm222, %v218, inf
    %224 = vmin.xlane.f32.xlu0 %v223
    %v225 = vpop.xlane.xlu0 %224
    %v226 = vcvt.f32.s32 %v225
    %v227 = vcvt.f32.s32 %v221
    %v228 = vshll.u32 %v227, 16
    %v229 = vadd.s32 %v228, %v226
    %v230 = vsel %vm162, %v214, 2147483647
    %v231 = vand.u32 %v230, 65535
    %v232 = vshra.s32 %v230, 16
    %v233 = vcvt.s32.f32 %v231
    %v234 = vcvt.s32.f32 %v232
    %235 = vmin.xlane.f32.xlu0 %v234
    %v236 = vpop.xlane.xlu0 %235
    %vm237 = vcmp.eq.f32.partialorder %v234, %v236
    %v238 = vsel %vm237, %v233, inf
    %239 = vmin.xlane.f32.xlu0 %v238
    %v240 = vpop.xlane.xlu0 %239
    %v241 = vcvt.f32.s32 %v240
    %v242 = vcvt.f32.s32 %v236
    %v243 = vshll.u32 %v242, 16
    %v244 = vadd.s32 %v243, %v241
    %vm245 = vcmp.eq.s32.totalorder %v229, %v156
    %vm246 = vcmp.eq.s32.totalorder %v244, %v157
    %v247 = vsel %vm245, 1, 0
    %v248 = vsel %vm246, 1, 0
    %v249 = vcvt.s32.f32 %v247
    %v250 = vcvt.s32.f32 %v248
    %v251 = vsel %vm195, %v249, 0.0
    %v252 = vsel %vm195, %v250, 0.0
    %v253 = vadd.f32 %v251, %v252
    %254 = vadd.xlane.f32.xlu0 %v253
    %v255 = vpop.xlane.xlu0 %254
    %v256 = vrot.slane %v255, 4
    %v257 = vadd.f32 %v255, %v256
    %v258 = vrot.slane %v257, 2
    %v259 = vadd.f32 %v257, %v258
    %v260 = vrot.slane %v259, 1
    %v261 = vadd.f32 %v259, %v260
    %s262 = vtos %v261
    %s263 = smul.f32 %s262, 0.0625
    %s264 = scalar_lea.smem [#allocation8], 0
    %265 = sst [smem:[%s264]] %s263
    // Predicated region
    $region18: #{tpu_custom_call.1} parent=1 // pred_check
      _
    $region19: #{tpu_custom_call.1} parent=1 // pred_check_branch
      %267 = sbr.rel (0) target = $region21
    $region20: #{tpu_custom_call.1} parent=1 // pred_region
      %269 = vsyncadd [#allocation4], 0
      %s271 = sshll.u32 %s2, 4
      %s272 = int_to_ptr.hbm [resolvable:$true] %s271
      %274 = dma.smem_to_hbm [#allocation7], 16, %s272, [#allocation4]
    $region21: #{tpu_custom_call.1} parent=1 // pred_fallthru
      _
    // Predicated region
    $region22: #{tpu_custom_call.1} parent=1 // pred_check
      _
    $region23: #{tpu_custom_call.1} parent=1 // pred_check_branch
      %276 = sbr.rel (0) target = $region25
    $region24: #{tpu_custom_call.1} parent=1 // pred_region
      %278 = vsyncadd [#allocation9], 0
      %s280 = sshll.u32 %s3, 4
      %s281 = int_to_ptr.hbm [resolvable:$true] %s280
      %283 = dma.smem_to_hbm [#allocation8], 16, %s281, [#allocation9]
    $region25: #{tpu_custom_call.1} parent=1 // pred_fallthru
      _
    // Predicated region
    $region26: #{tpu_custom_call.1} parent=1 // pred_check
      _
    $region27: #{tpu_custom_call.1} parent=1 // pred_check_branch
      %285 = sbr.rel (0) target = $region29
    $region28: #{tpu_custom_call.1} parent=1 // pred_region
      %287 = dma.done [#allocation4], 16
    $region29: #{tpu_custom_call.1} parent=1 // pred_fallthru
      _
    // Predicated region
    $region30: #{tpu_custom_call.1} parent=1 // pred_check
      _
    $region31: #{tpu_custom_call.1} parent=1 // pred_check_branch
      %289 = sbr.rel (0) target = $region33
    $region32: #{tpu_custom_call.1} parent=1 // pred_region
      %291 = dma.done [#allocation9], 16
    $region33: #{tpu_custom_call.1} parent=1 // pred_fallthru
      _
    %292 = sfence
    %293 = vsyncpa [#allocation3], 1
    %294 = vsyncpa [#allocation6], 1
    %295 = vsyncpa [#allocation4], 1
    %296 = vsyncpa [#allocation9], 1

</llo_original>
